<compile_context>
chip_gen: v6e
topology: v6e:2x2x1
jax: 0.10.0
libtpu: 0.0.40
codegen_flags: <defaults>
</compile_context>

<pallas_src>
import jax
import jax.numpy as jnp
from jax import lax
from jax.experimental import pallas as pl
from jax.experimental.pallas import tpu as pltpu


def _sdpa_dropout_kernel(thresh_ref,                      # SMEM: (1,) int32
                         q_ref, kbd_ref, vbd_ref, seg_ref, bits_ref,
                         o_ref):
    # Shapes seen by the kernel (leading batch dim squeezed by the BlockSpecs):
    #   q_ref    (S, H*Dk)    queries, heads on the lane axis (scale pre-folded)
    #   kbd_ref  (H*Dk, H*S)  block-diagonal K^T  -> heads never mix
    #   vbd_ref  (H*S, H*Dv)  block-diagonal V (pre-scaled by 1/(1-p))
    #   seg_ref  (H*S, H*S)   block-diagonal ones -> per-head denom broadcast
    #   bits_ref (S, H*S)     int32 uniform random bits for the dropout mask
    #   o_ref    (S, H*Dv)    lane-dense output slab
    q = q_ref[...]

    # logits[s, h*S + j] = scale * <q_h[s, :], k_h[j, :]>  (one MXU pass, no .T)
    logits = lax.dot_general(q, kbd_ref[...], (((1,), (0,)), ((), ())),
                             preferred_element_type=jnp.float32)

    # Per-head softmax along the lane axis.  A per-row global max is a valid
    # stabilizer for every head segment (softmax is shift-invariant segment-wise).
    m = jnp.max(logits, axis=-1, keepdims=True)
    e = jnp.exp(logits - m)
    # Per-head sums broadcast back across each head's lane segment (one MXU pass).
    denom = lax.dot_general(e, seg_ref[...], (((1,), (0,)), ((), ())),
                            preferred_element_type=jnp.float32)
    denom = jnp.maximum(denom, jnp.float32(1e-37))   # guard pathological underflow
    probs = e / denom

    # Dropout: integer-space threshold compare on raw bits (no int->float pass).
    keep = bits_ref[...] >= thresh_ref[0]
    dropped = jnp.where(keep, probs, jnp.float32(0.0))

    # output = dropped @ block-diag(V);  the 1/(1-p) rescale is folded into V.
    out = lax.dot_general(dropped, vbd_ref[...], (((1,), (0,)), ((), ())),
                          preferred_element_type=jnp.float32)
    o_ref[...] = out.astype(o_ref.dtype)


def _dropout_threshold_i32(p):
    """int32 threshold t such that P(uniform_int32_bits >= t) == 1 - p."""
    p = jnp.clip(jnp.asarray(p, jnp.float32), 0.0, 1.0)
    t = p * jnp.float32(4294967296.0) - jnp.float32(2147483648.0)
    # Clamp to exactly-representable f32 values inside the int32 range.
    t = jnp.clip(t, jnp.float32(-2147483648.0), jnp.float32(2147483520.0))
    return t.astype(jnp.int32)


def _block_diag_heads(x, row_is_seq):
    """(B, H, S, D) -> block-diagonal (B, H*S, H*D) or (B, H*D, H*S)."""
    B, H, S, D = x.shape
    eye = jnp.eye(H, dtype=x.dtype)
    if row_is_seq:   # V block-diag: rows = keys (H*S), cols = values (H*D)
        return jnp.einsum('bhsd,hg->bhsgd', x, eye).reshape(B, H * S, H * D)
    else:            # K^T block-diag: rows = features (H*D), cols = keys (H*S)
        return jnp.einsum('bhsd,hg->bhdgs', x, eye).reshape(B, H * D, H * S)


@jax.jit
def sdpa_with_dropout(q, k, v, scale_factor, dropout_p, rng_bits_i32):
    """dropout(softmax(scale * q @ k^T), p) @ v   for (B, H, S, D) tensors."""
    B, H, S, Dk = q.shape
    Dv = v.shape[-1]
    assert k.shape == (B, H, S, Dk) and v.shape == (B, H, S, Dv)
    assert rng_bits_i32.shape == (B, S, H * S)

    scale = jnp.asarray(scale_factor, jnp.float32)
    p = jnp.clip(jnp.asarray(dropout_p, jnp.float32), 0.0, 1.0)
    inv_keep = jnp.float32(1.0) / (jnp.float32(1.0) - p)   # PyTorch dropout rescale
    thresh = _dropout_threshold_i32(p).reshape(1)

    # Lane-dense presentation: heads folded onto the lane axis for q/k/v/out.
    q_cat = (jnp.transpose(q, (0, 2, 1, 3)).reshape(B, S, H * Dk)
             .astype(jnp.float32) * scale)                              # (B, S, H*Dk)
    k_bd = _block_diag_heads(k.astype(jnp.float32), row_is_seq=False)   # (B, H*Dk, H*S)
    v_bd = _block_diag_heads(v.astype(jnp.float32), row_is_seq=True) * inv_keep
    hid = jnp.arange(H * S, dtype=jnp.int32) // S
    seg = (hid[:, None] == hid[None, :]).astype(jnp.float32)            # (H*S, H*S)
    bits = rng_bits_i32.astype(jnp.int32)

    grid_spec = pltpu.PrefetchScalarGridSpec(
        num_scalar_prefetch=1,            # int32 dropout threshold -> SMEM
        grid=(B,),                        # B == 1 -> a single kernel invocation
        in_specs=[
            pl.BlockSpec((None, S, H * Dk), lambda b, *_: (b, 0, 0)),
            pl.BlockSpec((None, H * Dk, H * S), lambda b, *_: (b, 0, 0)),
            pl.BlockSpec((None, H * S, H * Dv), lambda b, *_: (b, 0, 0)),
            pl.BlockSpec((H * S, H * S), lambda b, *_: (0, 0)),
            pl.BlockSpec((None, S, H * S), lambda b, *_: (b, 0, 0)),
        ],
        out_specs=pl.BlockSpec((None, S, H * Dv), lambda b, *_: (b, 0, 0)),
    )

    out_cat = pl.pallas_call(
        _sdpa_dropout_kernel,
        out_shape=jax.ShapeDtypeStruct((B, S, H * Dv), jnp.float32),
        grid_spec=grid_spec,
        compiler_params=pltpu.CompilerParams(
            dimension_semantics=("parallel",),
        ),
    )(thresh, q_cat, k_bd, v_bd, seg, bits)

    # Back to PyTorch's (B, H, S, Dv) layout.
    return jnp.transpose(out_cat.reshape(B, S, H, Dv), (0, 2, 1, 3)).astype(q.dtype)


if __name__ == "__main__":
    B, H, S, Dk, Dv = 1, 4, 64, 64, 64     # consistent head count; 64x64 matrices

    key = jax.random.PRNGKey(0)
    kq, kk, kv, kd = jax.random.split(key, 4)
    q1 = jax.random.normal(kq, (B, H, S, Dk), dtype=jnp.float32)
    k1 = jax.random.normal(kk, (B, H, S, Dk), dtype=jnp.float32)
    v1 = jax.random.normal(kv, (B, H, S, Dv), dtype=jnp.float32)
    scale_factor = 1.0
    dropout_p = 0.5

    # Uniform random bits for the dropout mask, in the kernel's (B, S, H*S) layout.
    bits_u32 = jax.random.bits(kd, (B, S, H * S), dtype=jnp.uint32)
    bits_i32 = jax.lax.bitcast_convert_type(bits_u32, jnp.int32)

    out = sdpa_with_dropout(q1, k1, v1, scale_factor, dropout_p, bits_i32)
    out = jax.block_until_ready(out)
    assert out.shape == (B, H, S, Dv)
    assert bool(jnp.isfinite(out).all())

    # Pure-JAX reference using the identical dropout mask.
    thresh = _dropout_threshold_i32(dropout_p)
    inv_keep = 1.0 / (1.0 - dropout_p)
    logits = jnp.einsum('bhsd,bhjd->bhsj', q1, k1,
                        precision=jax.lax.Precision.HIGHEST) * scale_factor
    probs = jax.nn.softmax(logits, axis=-1)
    keep = bits_i32.reshape(B, S, H, S).transpose(0, 2, 1, 3) >= thresh
    dropped = jnp.where(keep, probs * inv_keep, 0.0)
    ref = jnp.einsum('bhsj,bhjd->bhsd', dropped, v1,
                     precision=jax.lax.Precision.HIGHEST)
    # Loose tolerance covers MXU f32 precision-mode differences; real layout /
    # mask / normalization bugs would produce O(1) errors.
    max_err = float(jnp.max(jnp.abs(out - ref)))
    assert jnp.allclose(out, ref, rtol=5e-2, atol=5e-2), max_err

    print("KERNEL_OK")
</pallas_src>

<mosaic_0001>
module attributes {stable_mosaic.version = 11 : i64} {
  func.func @_sdpa_dropout_kernel(%arg0: i32, %arg1: memref<1xi32, #tpu.memory_space<smem>>, %arg2: memref<1x64x256xf32, #tpu.memory_space<vmem>>, %arg3: memref<1x256x256xf32, #tpu.memory_space<vmem>>, %arg4: memref<1x256x256xf32, #tpu.memory_space<vmem>>, %arg5: memref<256x256xf32, #tpu.memory_space<vmem>>, %arg6: memref<1x64x256xi32, #tpu.memory_space<vmem>>, %arg7: memref<1x64x256xf32, #tpu.memory_space<vmem>>) attributes {dimension_semantics = [#tpu.dimension_semantics<parallel>], iteration_bounds = array<i64: 1>, scalar_prefetch = 1 : i64, scratch_operands = 0 : i64, tpu.core_type = #tpu.core_type<tc>, window_params = [{transform_indices = @transform_0, window_bounds = array<i64: 1, 64, 256>}, {transform_indices = @transform_1, window_bounds = array<i64: 1, 256, 256>}, {transform_indices = @transform_2, window_bounds = array<i64: 1, 256, 256>}, {pipeline_mode = #tpu.pipeline_mode<synchronous>, transform_indices = @transform_3, window_bounds = array<i64: 256, 256>}, {transform_indices = @transform_4, window_bounds = array<i64: 1, 64, 256>}, {transform_indices = @transform_5, window_bounds = array<i64: 1, 64, 256>}]} {
    %c0 = arith.constant 0 : index
    %c0_0 = arith.constant 0 : index
    %c0_1 = arith.constant 0 : index
    %0 = vector.load %arg2[%c0, %c0_0, %c0_1] : memref<1x64x256xf32, #tpu.memory_space<vmem>>, vector<1x64x256xf32>
    %1 = vector.shape_cast %0 : vector<1x64x256xf32> to vector<64x256xf32>
    %c0_2 = arith.constant 0 : index
    %c0_3 = arith.constant 0 : index
    %c0_4 = arith.constant 0 : index
    %2 = vector.load %arg3[%c0_2, %c0_3, %c0_4] : memref<1x256x256xf32, #tpu.memory_space<vmem>>, vector<1x256x256xf32>
    %3 = vector.shape_cast %2 : vector<1x256x256xf32> to vector<256x256xf32>
    %cst = arith.constant dense<0.000000e+00> : vector<64x256xf32>
    %4 = tpu.matmul %1, %3, %cst {dimension_numbers = #tpu.dot_dimension_numbers<[1], [0], [0], [1], [0, 0, 1, 1], [], []>} : vector<64x256xf32>, vector<256x256xf32>, vector<64x256xf32> -> vector<64x256xf32>
    %cst_5 = arith.constant dense<0xFF800000> : vector<64xf32>
    %5 = vector.multi_reduction <maximumf>, %4, %cst_5 [1] : vector<64x256xf32> to vector<64xf32>
    %6 = vector.shape_cast %5 : vector<64xf32> to vector<64x1xf32>
    %7 = vector.broadcast %6 : vector<64x1xf32> to vector<64x256xf32>
    %8 = arith.subf %4, %7 : vector<64x256xf32>
    %9 = math.exp %8 : vector<64x256xf32>
    %c0_6 = arith.constant 0 : index
    %c0_7 = arith.constant 0 : index
    %10 = vector.load %arg5[%c0_6, %c0_7] : memref<256x256xf32, #tpu.memory_space<vmem>>, vector<256x256xf32>
    %cst_8 = arith.constant dense<0.000000e+00> : vector<64x256xf32>
    %11 = tpu.matmul %9, %10, %cst_8 {dimension_numbers = #tpu.dot_dimension_numbers<[1], [0], [0], [1], [0, 0, 1, 1], [], []>} : vector<64x256xf32>, vector<256x256xf32>, vector<64x256xf32> -> vector<64x256xf32>
    %cst_9 = arith.constant 9.99999991E-38 : f32
    %12 = vector.broadcast %cst_9 : f32 to vector<64x256xf32>
    %13 = arith.maximumf %11, %12 : vector<64x256xf32>
    %14 = arith.divf %9, %13 : vector<64x256xf32>
    %c0_10 = arith.constant 0 : index
    %c0_11 = arith.constant 0 : index
    %c0_12 = arith.constant 0 : index
    %15 = vector.load %arg6[%c0_10, %c0_11, %c0_12] : memref<1x64x256xi32, #tpu.memory_space<vmem>>, vector<1x64x256xi32>
    %16 = vector.shape_cast %15 : vector<1x64x256xi32> to vector<64x256xi32>
    %c0_13 = arith.constant 0 : index
    %17 = memref.load %arg1[%c0_13] : memref<1xi32, #tpu.memory_space<smem>>
    %18 = vector.broadcast %17 : i32 to vector<64x256xi32>
    %19 = arith.cmpi sge, %16, %18 : vector<64x256xi32>
    %cst_14 = arith.constant 0.000000e+00 : f32
    %20 = vector.broadcast %cst_14 : f32 to vector<64x256xf32>
    %21 = arith.select %19, %14, %20 : vector<64x256xi1>, vector<64x256xf32>
    %c0_15 = arith.constant 0 : index
    %c0_16 = arith.constant 0 : index
    %c0_17 = arith.constant 0 : index
    %22 = vector.load %arg4[%c0_15, %c0_16, %c0_17] : memref<1x256x256xf32, #tpu.memory_space<vmem>>, vector<1x256x256xf32>
    %23 = vector.shape_cast %22 : vector<1x256x256xf32> to vector<256x256xf32>
    %cst_18 = arith.constant dense<0.000000e+00> : vector<64x256xf32>
    %24 = tpu.matmul %21, %23, %cst_18 {dimension_numbers = #tpu.dot_dimension_numbers<[1], [0], [0], [1], [0, 0, 1, 1], [], []>} : vector<64x256xf32>, vector<256x256xf32>, vector<64x256xf32> -> vector<64x256xf32>
    %c0_19 = arith.constant 0 : index
    %c0_20 = arith.constant 0 : index
    %c0_21 = arith.constant 0 : index
    %25 = vector.load %arg7[%c0_19, %c0_20, %c0_21] : memref<1x64x256xf32, #tpu.memory_space<vmem>>, vector<1x64x256xf32>
    %26 = vector.shape_cast %25 : vector<1x64x256xf32> to vector<64x256xf32>
    %27 = vector.shape_cast %24 : vector<64x256xf32> to vector<1x64x256xf32>
    tpu.vector_store %arg7[%c0_19, %c0_20, %c0_21], %27 {strides = array<i32>} : memref<1x64x256xf32, #tpu.memory_space<vmem>>, vector<1x64x256xf32>,
    return
  }
  func.func @transform_0(%arg0: i32, %arg1: memref<1xi32, #tpu.memory_space<smem>>) -> (i32, i32, i32) {
    %c0_i32 = arith.constant 0 : i32
    %c0_i32_0 = arith.constant 0 : i32
    %c0_i32_1 = arith.constant 0 : i32
    return %arg0, %c0_i32, %c0_i32_0 : i32, i32, i32
  }
  func.func @transform_1(%arg0: i32, %arg1: memref<1xi32, #tpu.memory_space<smem>>) -> (i32, i32, i32) {
    %c0_i32 = arith.constant 0 : i32
    %c0_i32_0 = arith.constant 0 : i32
    %c0_i32_1 = arith.constant 0 : i32
    return %arg0, %c0_i32, %c0_i32_0 : i32, i32, i32
  }
  func.func @transform_2(%arg0: i32, %arg1: memref<1xi32, #tpu.memory_space<smem>>) -> (i32, i32, i32) {
    %c0_i32 = arith.constant 0 : i32
    %c0_i32_0 = arith.constant 0 : i32
    %c0_i32_1 = arith.constant 0 : i32
    return %arg0, %c0_i32, %c0_i32_0 : i32, i32, i32
  }
  func.func @transform_3(%arg0: i32, %arg1: memref<1xi32, #tpu.memory_space<smem>>) -> (i32, i32) {
    %c0_i32 = arith.constant 0 : i32
    %c0_i32_0 = arith.constant 0 : i32
    %c0_i32_1 = arith.constant 0 : i32
    return %c0_i32, %c0_i32_0 : i32, i32
  }
  func.func @transform_4(%arg0: i32, %arg1: memref<1xi32, #tpu.memory_space<smem>>) -> (i32, i32, i32) {
    %c0_i32 = arith.constant 0 : i32
    %c0_i32_0 = arith.constant 0 : i32
    %c0_i32_1 = arith.constant 0 : i32
    return %arg0, %c0_i32, %c0_i32_0 : i32, i32, i32
  }
  func.func @transform_5(%arg0: i32, %arg1: memref<1xi32, #tpu.memory_space<smem>>) -> (i32, i32, i32) {
    %c0_i32 = arith.constant 0 : i32
    %c0_i32_0 = arith.constant 0 : i32
    %c0_i32_1 = arith.constant 0 : i32
    return %arg0, %c0_i32, %c0_i32_0 : i32, i32, i32
  }
}

</mosaic_0001>

<llo_original>
// kernel: sdpa_with_dropout.1
$region0: #{sdpa_with_dropout.1}
  #allocation0 [shape = 'u32[]', space=smem, size = 0x4, offset = 0x4, fixed_abs, tag = 'smem constant byte address 0x4 - core index']
  #allocation1 [shape = 'u32[144,128]{1,0:T(1,128)}', space=vmem, size = 0x12000, scoped, tag = 'internal scratch']
  #allocation2 [shape = 's32[1]{0}', space=sflag, size = 0x4, scoped, tag = 'scoped memory for sdpa_with_dropout.1']
  #allocation3 [shape = 's32[1]{0:T(128)S(6)}', space=smem, size = 0x200, scoped, tag = 'prefetched SMEM operand 0']
  %s0 = inlined_call_operand.<no memory space> [shape: s32[1], index: 0, kind: input, shape index: {}]
  %s1 = inlined_call_operand.vmem [shape: f32[1,64,256], index: 1, kind: input, shape index: {}]
  %s2 = inlined_call_operand.vmem [shape: f32[1,256,256], index: 2, kind: input, shape index: {}]
  %s3 = inlined_call_operand.vmem [shape: f32[1,256,256], index: 3, kind: input, shape index: {}]
  %s4 = inlined_call_operand.vmem [shape: f32[256,256], index: 4, kind: input, shape index: {}]
  %s5 = inlined_call_operand.vmem [shape: s32[1,64,256], index: 5, kind: input, shape index: {}]
  %s6 = inlined_call_operand.vmem [shape: f32[1,64,256], index: 6, kind: output, shape index: {}]
  %s7 = sld [smem:[#allocation0]]
  $region30: #{sdpa_with_dropout.1} parent=0
    _
  %s9 = ssub.s32 1, %s7
  %s10 = scalar_select 0, %s9, %s7
  %11 = sst [smem:[#allocation3]] %s0
  // Predicated region
  $region2: #{sdpa_with_dropout.1} parent=0 // pred_check
    _
  $region3: #{sdpa_with_dropout.1} parent=0 // pred_check_branch
    %13 = sbr.rel (0) target = $region5
  $region4: #{sdpa_with_dropout.1} parent=0 // pred_region
    _
  $region5: #{sdpa_with_dropout.1} parent=0 // pred_fallthru
    _
  // Predicated region
  $region6: #{sdpa_with_dropout.1} parent=0 // pred_check
    _
  $region7: #{sdpa_with_dropout.1} parent=0 // pred_check_branch
    %15 = sbr.rel (0) target = $region9
  $region8: #{sdpa_with_dropout.1} parent=0 // pred_region
    _
  $region9: #{sdpa_with_dropout.1} parent=0 // pred_fallthru
    _
  // Predicated region
  $region10: #{sdpa_with_dropout.1} parent=0 // pred_check
    _
  $region11: #{sdpa_with_dropout.1} parent=0 // pred_check_branch
    %17 = sbr.rel (0) target = $region13
  $region12: #{sdpa_with_dropout.1} parent=0 // pred_region
    _
  $region13: #{sdpa_with_dropout.1} parent=0 // pred_fallthru
    _
  // Predicated region
  $region14: #{sdpa_with_dropout.1} parent=0 // pred_check
    _
  $region15: #{sdpa_with_dropout.1} parent=0 // pred_check_branch
    %19 = sbr.rel (0) target = $region17
  $region16: #{sdpa_with_dropout.1} parent=0 // pred_region
    _
  $region17: #{sdpa_with_dropout.1} parent=0 // pred_fallthru
    _
  // Predicated region
  $region18: #{sdpa_with_dropout.1} parent=0 // pred_check
    _
  $region19: #{sdpa_with_dropout.1} parent=0 // pred_check_branch
    %21 = sbr.rel (0) target = $region21
  $region20: #{sdpa_with_dropout.1} parent=0 // pred_region
    _
  $region21: #{sdpa_with_dropout.1} parent=0 // pred_fallthru
    _
  %v22 = vld [vmem:[%s1] sm:$0xff]
  %v23 = vld [vmem:[%s1 + $0x8] sm:$0xff]
  %v24 = vld [vmem:[%s1 + $0x10] sm:$0xff]
  %v25 = vld [vmem:[%s1 + $0x18] sm:$0xff]
  %v26 = vld [vmem:[%s1 + $0x20] sm:$0xff]
  %v27 = vld [vmem:[%s1 + $0x28] sm:$0xff]
  %v28 = vld [vmem:[%s1 + $0x30] sm:$0xff]
  %v29 = vld [vmem:[%s1 + $0x38] sm:$0xff]
  %v30 = vld [vmem:[%s1 + $0x40] sm:$0xff]
  %v31 = vld [vmem:[%s1 + $0x48] sm:$0xff]
  %v32 = vld [vmem:[%s1 + $0x50] sm:$0xff]
  %v33 = vld [vmem:[%s1 + $0x58] sm:$0xff]
  %v34 = vld [vmem:[%s1 + $0x60] sm:$0xff]
  %v35 = vld [vmem:[%s1 + $0x68] sm:$0xff]
  %v36 = vld [vmem:[%s1 + $0x70] sm:$0xff]
  %v37 = vld [vmem:[%s1 + $0x78] sm:$0xff]
  %v38 = vld [vmem:[%s2] sm:$0xff]
  %v39 = vld [vmem:[%s2 + $0x8] sm:$0xff]
  %v40 = vld [vmem:[%s2 + $0x10] sm:$0xff]
  %v41 = vld [vmem:[%s2 + $0x18] sm:$0xff]
  %v42 = vld [vmem:[%s2 + $0x20] sm:$0xff]
  %v43 = vld [vmem:[%s2 + $0x28] sm:$0xff]
  %v44 = vld [vmem:[%s2 + $0x30] sm:$0xff]
  %v45 = vld [vmem:[%s2 + $0x38] sm:$0xff]
  %v46 = vld [vmem:[%s2 + $0x40] sm:$0xff]
  %v47 = vld [vmem:[%s2 + $0x48] sm:$0xff]
  %v48 = vld [vmem:[%s2 + $0x50] sm:$0xff]
  %v49 = vld [vmem:[%s2 + $0x58] sm:$0xff]
  %v50 = vld [vmem:[%s2 + $0x60] sm:$0xff]
  %v51 = vld [vmem:[%s2 + $0x68] sm:$0xff]
  %v52 = vld [vmem:[%s2 + $0x70] sm:$0xff]
  %v53 = vld [vmem:[%s2 + $0x78] sm:$0xff]
  %v54 = vld [vmem:[%s2 + $0x80] sm:$0xff]
  %v55 = vld [vmem:[%s2 + $0x88] sm:$0xff]
  %v56 = vld [vmem:[%s2 + $0x90] sm:$0xff]
  %v57 = vld [vmem:[%s2 + $0x98] sm:$0xff]
  %v58 = vld [vmem:[%s2 + $0xa0] sm:$0xff]
  %v59 = vld [vmem:[%s2 + $0xa8] sm:$0xff]
  %v60 = vld [vmem:[%s2 + $0xb0] sm:$0xff]
  %v61 = vld [vmem:[%s2 + $0xb8] sm:$0xff]
  %v62 = vld [vmem:[%s2 + $0xc0] sm:$0xff]
  %v63 = vld [vmem:[%s2 + $0xc8] sm:$0xff]
  %v64 = vld [vmem:[%s2 + $0xd0] sm:$0xff]
  %v65 = vld [vmem:[%s2 + $0xd8] sm:$0xff]
  %v66 = vld [vmem:[%s2 + $0xe0] sm:$0xff]
  %v67 = vld [vmem:[%s2 + $0xe8] sm:$0xff]
  %v68 = vld [vmem:[%s2 + $0xf0] sm:$0xff]
  %v69 = vld [vmem:[%s2 + $0xf8] sm:$0xff]
  %v70 = vld [vmem:[%s2 + $0x100] sm:$0xff]
  %v71 = vld [vmem:[%s2 + $0x108] sm:$0xff]
  %v72 = vld [vmem:[%s2 + $0x110] sm:$0xff]
  %v73 = vld [vmem:[%s2 + $0x118] sm:$0xff]
  %v74 = vld [vmem:[%s2 + $0x120] sm:$0xff]
  %v75 = vld [vmem:[%s2 + $0x128] sm:$0xff]
  %v76 = vld [vmem:[%s2 + $0x130] sm:$0xff]
  %v77 = vld [vmem:[%s2 + $0x138] sm:$0xff]
  %v78 = vld [vmem:[%s2 + $0x140] sm:$0xff]
  %v79 = vld [vmem:[%s2 + $0x148] sm:$0xff]
  %v80 = vld [vmem:[%s2 + $0x150] sm:$0xff]
  %v81 = vld [vmem:[%s2 + $0x158] sm:$0xff]
  %v82 = vld [vmem:[%s2 + $0x160] sm:$0xff]
  %v83 = vld [vmem:[%s2 + $0x168] sm:$0xff]
  %v84 = vld [vmem:[%s2 + $0x170] sm:$0xff]
  %v85 = vld [vmem:[%s2 + $0x178] sm:$0xff]
  %v86 = vld [vmem:[%s2 + $0x180] sm:$0xff]
  %v87 = vld [vmem:[%s2 + $0x188] sm:$0xff]
  %v88 = vld [vmem:[%s2 + $0x190] sm:$0xff]
  %v89 = vld [vmem:[%s2 + $0x198] sm:$0xff]
  %v90 = vld [vmem:[%s2 + $0x1a0] sm:$0xff]
  %v91 = vld [vmem:[%s2 + $0x1a8] sm:$0xff]
  %v92 = vld [vmem:[%s2 + $0x1b0] sm:$0xff]
  %v93 = vld [vmem:[%s2 + $0x1b8] sm:$0xff]
  %v94 = vld [vmem:[%s2 + $0x1c0] sm:$0xff]
  %v95 = vld [vmem:[%s2 + $0x1c8] sm:$0xff]
  %v96 = vld [vmem:[%s2 + $0x1d0] sm:$0xff]
  %v97 = vld [vmem:[%s2 + $0x1d8] sm:$0xff]
  %v98 = vld [vmem:[%s2 + $0x1e0] sm:$0xff]
  %v99 = vld [vmem:[%s2 + $0x1e8] sm:$0xff]
  %v100 = vld [vmem:[%s2 + $0x1f0] sm:$0xff]
  %v101 = vld [vmem:[%s2 + $0x1f8] sm:$0xff]
  %102 = vmatprep.subr.mxu0 %v69
  %103 = vmatpush1.msra.mxu0 %v68
  %104 = vmatprep.subr.mxu0 %v67
  %105 = vmatpush1.msra.mxu0 %v66
  %106 = vmatprep.subr.mxu0 %v65
  %107 = vmatpush1.msra.mxu0 %v64
  %108 = vmatprep.subr.mxu0 %v63
  %109 = vmatpush1.msra.mxu0 %v62
  %110 = vmatprep.subr.mxu0 %v61
  %111 = vmatpush1.msra.mxu0 %v60
  %112 = vmatprep.subr.mxu0 %v59
  %113 = vmatpush1.msra.mxu0 %v58
  %114 = vmatprep.subr.mxu0 %v57
  %115 = vmatpush1.msra.mxu0 %v56
  %116 = vmatprep.subr.mxu0 %v55
  %117 = vmatpush1.msra.mxu0 %v54
  %118 = vmatprep.subr.mxu0 %v53
  %119 = vmatpush1.msra.mxu0 %v52
  %120 = vmatprep.subr.mxu0 %v51
  %121 = vmatpush1.msra.mxu0 %v50
  %122 = vmatprep.subr.mxu0 %v49
  %123 = vmatpush1.msra.mxu0 %v48
  %124 = vmatprep.subr.mxu0 %v47
  %125 = vmatpush1.msra.mxu0 %v46
  %126 = vmatprep.subr.mxu0 %v45
  %127 = vmatpush1.msra.mxu0 %v44
  %128 = vmatprep.subr.mxu0 %v43
  %129 = vmatpush1.msra.mxu0 %v42
  %130 = vmatprep.subr.mxu0 %v41
  %131 = vmatpush1.msra.mxu0 %v40
  %132 = vmatprep.subr.mxu0 %v39
  %133 = vmatpush1.msra.mxu0 %v38
  %134 = vmatprep.subr.mxu0 %v101
  %135 = vmatpush2.msra.mxu0 %v100
  %136 = vmatprep.subr.mxu0 %v99
  %137 = vmatpush2.msra.mxu0 %v98
  %138 = vmatprep.subr.mxu0 %v97
  %139 = vmatpush2.msra.mxu0 %v96
  %140 = vmatprep.subr.mxu0 %v95
  %141 = vmatpush2.msra.mxu0 %v94
  %142 = vmatprep.subr.mxu0 %v93
  %143 = vmatpush2.msra.mxu0 %v92
  %144 = vmatprep.subr.mxu0 %v91
  %145 = vmatpush2.msra.mxu0 %v90
  %146 = vmatprep.subr.mxu0 %v89
  %147 = vmatpush2.msra.mxu0 %v88
  %148 = vmatprep.subr.mxu0 %v87
  %149 = vmatpush2.msra.mxu0 %v86
  %150 = vmatprep.subr.mxu0 %v85
  %151 = vmatpush2.msra.mxu0 %v84
  %152 = vmatprep.subr.mxu0 %v83
  %153 = vmatpush2.msra.mxu0 %v82
  %154 = vmatprep.subr.mxu0 %v81
  %155 = vmatpush2.msra.mxu0 %v80
  %156 = vmatprep.subr.mxu0 %v79
  %157 = vmatpush2.msra.mxu0 %v78
  %158 = vmatprep.subr.mxu0 %v77
  %159 = vmatpush2.msra.mxu0 %v76
  %160 = vmatprep.subr.mxu0 %v75
  %161 = vmatpush2.msra.mxu0 %v74
  %162 = vmatprep.subr.mxu0 %v73
  %163 = vmatpush2.msra.mxu0 %v72
  %164 = vmatprep.subr.mxu0 %v71
  %165 = vmatpush2.msra.mxu0 %v70
  %166 = vmatprep.mubr.f32.mxu0 %v23
  %167 = vmatmul.mubr.f32.gmra.mxu0 %v22
  %v168 = vpop.f32.mrf.mxu0
  %v169 = vadd.f32 0.0, %v168
  %v170 = vpop.f32.mrf.mxu0
  %v171 = vadd.f32 0.0, %v170
  %172 = vmatprep.mubr.f32.mxu0 %v25
  %173 = vmatmul.mubr.f32.gmra.mxu0 %v24
  %v174 = vpop.f32.mrf.mxu0
  %v175 = vadd.f32 0.0, %v174
  %v176 = vpop.f32.mrf.mxu0
  %v177 = vadd.f32 0.0, %v176
  %178 = vmatprep.mubr.f32.mxu0 %v27
  %179 = vmatmul.mubr.f32.gmra.mxu0 %v26
  %v180 = vpop.f32.mrf.mxu0
  %v181 = vadd.f32 0.0, %v180
  %v182 = vpop.f32.mrf.mxu0
  %v183 = vadd.f32 0.0, %v182
  %184 = vmatprep.mubr.f32.mxu0 %v29
  %185 = vmatmul.mubr.f32.gmra.mxu0 %v28
  %v186 = vpop.f32.mrf.mxu0
  %v187 = vadd.f32 0.0, %v186
  %v188 = vpop.f32.mrf.mxu0
  %v189 = vadd.f32 0.0, %v188
  %190 = vmatprep.mubr.f32.mxu0 %v31
  %191 = vmatmul.mubr.f32.gmra.mxu0 %v30
  %v192 = vpop.f32.mrf.mxu0
  %v193 = vadd.f32 0.0, %v192
  %v194 = vpop.f32.mrf.mxu0
  %v195 = vadd.f32 0.0, %v194
  %196 = vmatprep.mubr.f32.mxu0 %v33
  %197 = vmatmul.mubr.f32.gmra.mxu0 %v32
  %v198 = vpop.f32.mrf.mxu0
  %v199 = vadd.f32 0.0, %v198
  %v200 = vpop.f32.mrf.mxu0
  %v201 = vadd.f32 0.0, %v200
  %202 = vmatprep.mubr.f32.mxu0 %v35
  %203 = vmatmul.mubr.f32.gmra.mxu0 %v34
  %v204 = vpop.f32.mrf.mxu0
  %v205 = vadd.f32 0.0, %v204
  %v206 = vpop.f32.mrf.mxu0
  %v207 = vadd.f32 0.0, %v206
  %208 = vmatprep.mubr.f32.mxu0 %v37
  %209 = vmatmul.mubr.f32.gmra.mxu0 %v36
  %v210 = vpop.f32.mrf.mxu0
  %v211 = vadd.f32 0.0, %v210
  %v212 = vpop.f32.mrf.mxu0
  %v213 = vadd.f32 0.0, %v212
  %214 = vdwg.mxu0
  %v215 = vmax.f32 %v169, %v171
  %216 = vmax.xlane.f32.xlu0 %v215
  %v217 = vpop.xlane.xlu0 %216
  %v218 = vmax.f32 %v175, %v177
  %219 = vmax.xlane.f32.xlu0 %v218
  %v220 = vpop.xlane.xlu0 %219
  %v221 = vmax.f32 %v181, %v183
  %222 = vmax.xlane.f32.xlu0 %v221
  %v223 = vpop.xlane.xlu0 %222
  %v224 = vmax.f32 %v187, %v189
  %225 = vmax.xlane.f32.xlu0 %v224
  %v226 = vpop.xlane.xlu0 %225
  %v227 = vmax.f32 %v193, %v195
  %228 = vmax.xlane.f32.xlu0 %v227
  %v229 = vpop.xlane.xlu0 %228
  %v230 = vmax.f32 %v199, %v201
  %231 = vmax.xlane.f32.xlu0 %v230
  %v232 = vpop.xlane.xlu0 %231
  %v233 = vmax.f32 %v205, %v207
  %234 = vmax.xlane.f32.xlu0 %v233
  %v235 = vpop.xlane.xlu0 %234
  %v236 = vmax.f32 %v211, %v213
  %237 = vmax.xlane.f32.xlu0 %v236
  %v238 = vpop.xlane.xlu0 %237
  %v239 = vsub.f32 %v169, %v217
  %v240 = vsub.f32 %v171, %v217
  %v241 = vsub.f32 %v175, %v220
  %v242 = vsub.f32 %v177, %v220
  %v243 = vsub.f32 %v181, %v223
  %v244 = vsub.f32 %v183, %v223
  %v245 = vsub.f32 %v187, %v226
  %v246 = vsub.f32 %v189, %v226
  %v247 = vsub.f32 %v193, %v229
  %v248 = vsub.f32 %v195, %v229
  %v249 = vsub.f32 %v199, %v232
  %v250 = vsub.f32 %v201, %v232
  %v251 = vsub.f32 %v205, %v235
  %v252 = vsub.f32 %v207, %v235
  %v253 = vsub.f32 %v211, %v238
  %v254 = vsub.f32 %v213, %v238
  %v255 = vmul.f32 %v239, 1.442695
  %v256 = vpow.pop %v255
  %v257 = vmul.f32 %v240, 1.442695
  %v258 = vpow.pop %v257
  %v259 = vmul.f32 %v241, 1.442695
  %v260 = vpow.pop %v259
  %v261 = vmul.f32 %v242, 1.442695
  %v262 = vpow.pop %v261
  %v263 = vmul.f32 %v243, 1.442695
  %v264 = vpow.pop %v263
  %v265 = vmul.f32 %v244, 1.442695
  %v266 = vpow.pop %v265
  %v267 = vmul.f32 %v245, 1.442695
  %v268 = vpow.pop %v267
  %v269 = vmul.f32 %v246, 1.442695
  %v270 = vpow.pop %v269
  %v271 = vmul.f32 %v247, 1.442695
  %v272 = vpow.pop %v271
  %v273 = vmul.f32 %v248, 1.442695
  %v274 = vpow.pop %v273
  %v275 = vmul.f32 %v249, 1.442695
  %v276 = vpow.pop %v275
  %v277 = vmul.f32 %v250, 1.442695
  %v278 = vpow.pop %v277
  %v279 = vmul.f32 %v251, 1.442695
  %v280 = vpow.pop %v279
  %v281 = vmul.f32 %v252, 1.442695
  %v282 = vpow.pop %v281
  %v283 = vmul.f32 %v253, 1.442695
  %v284 = vpow.pop %v283
  %v285 = vmul.f32 %v254, 1.442695
  %v286 = vpow.pop %v285
  %v287 = vld [vmem:[%s4] sm:$0xff]
  %v288 = vld [vmem:[%s4 + $0x8] sm:$0xff]
  %v289 = vld [vmem:[%s4 + $0x10] sm:$0xff]
  %v290 = vld [vmem:[%s4 + $0x18] sm:$0xff]
  %v291 = vld [vmem:[%s4 + $0x20] sm:$0xff]
  %v292 = vld [vmem:[%s4 + $0x28] sm:$0xff]
  %v293 = vld [vmem:[%s4 + $0x30] sm:$0xff]
  %v294 = vld [vmem:[%s4 + $0x38] sm:$0xff]
  %v295 = vld [vmem:[%s4 + $0x40] sm:$0xff]
  %v296 = vld [vmem:[%s4 + $0x48] sm:$0xff]
  %v297 = vld [vmem:[%s4 + $0x50] sm:$0xff]
  %v298 = vld [vmem:[%s4 + $0x58] sm:$0xff]
  %v299 = vld [vmem:[%s4 + $0x60] sm:$0xff]
  %v300 = vld [vmem:[%s4 + $0x68] sm:$0xff]
  %v301 = vld [vmem:[%s4 + $0x70] sm:$0xff]
  %v302 = vld [vmem:[%s4 + $0x78] sm:$0xff]
  %v303 = vld [vmem:[%s4 + $0x80] sm:$0xff]
  %v304 = vld [vmem:[%s4 + $0x88] sm:$0xff]
  %v305 = vld [vmem:[%s4 + $0x90] sm:$0xff]
  %v306 = vld [vmem:[%s4 + $0x98] sm:$0xff]
  %v307 = vld [vmem:[%s4 + $0xa0] sm:$0xff]
  %v308 = vld [vmem:[%s4 + $0xa8] sm:$0xff]
  %v309 = vld [vmem:[%s4 + $0xb0] sm:$0xff]
  %v310 = vld [vmem:[%s4 + $0xb8] sm:$0xff]
  %v311 = vld [vmem:[%s4 + $0xc0] sm:$0xff]
  %v312 = vld [vmem:[%s4 + $0xc8] sm:$0xff]
  %v313 = vld [vmem:[%s4 + $0xd0] sm:$0xff]
  %v314 = vld [vmem:[%s4 + $0xd8] sm:$0xff]
  %v315 = vld [vmem:[%s4 + $0xe0] sm:$0xff]
  %v316 = vld [vmem:[%s4 + $0xe8] sm:$0xff]
  %v317 = vld [vmem:[%s4 + $0xf0] sm:$0xff]
  %v318 = vld [vmem:[%s4 + $0xf8] sm:$0xff]
  %v319 = vld [vmem:[%s4 + $0x100] sm:$0xff]
  %v320 = vld [vmem:[%s4 + $0x108] sm:$0xff]
  %v321 = vld [vmem:[%s4 + $0x110] sm:$0xff]
  %v322 = vld [vmem:[%s4 + $0x118] sm:$0xff]
  %v323 = vld [vmem:[%s4 + $0x120] sm:$0xff]
  %v324 = vld [vmem:[%s4 + $0x128] sm:$0xff]
  %v325 = vld [vmem:[%s4 + $0x130] sm:$0xff]
  %v326 = vld [vmem:[%s4 + $0x138] sm:$0xff]
  %v327 = vld [vmem:[%s4 + $0x140] sm:$0xff]
  %v328 = vld [vmem:[%s4 + $0x148] sm:$0xff]
  %v329 = vld [vmem:[%s4 + $0x150] sm:$0xff]
  %v330 = vld [vmem:[%s4 + $0x158] sm:$0xff]
  %v331 = vld [vmem:[%s4 + $0x160] sm:$0xff]
  %v332 = vld [vmem:[%s4 + $0x168] sm:$0xff]
  %v333 = vld [vmem:[%s4 + $0x170] sm:$0xff]
  %v334 = vld [vmem:[%s4 + $0x178] sm:$0xff]
  %v335 = vld [vmem:[%s4 + $0x180] sm:$0xff]
  %v336 = vld [vmem:[%s4 + $0x188] sm:$0xff]
  %v337 = vld [vmem:[%s4 + $0x190] sm:$0xff]
  %v338 = vld [vmem:[%s4 + $0x198] sm:$0xff]
  %v339 = vld [vmem:[%s4 + $0x1a0] sm:$0xff]
  %v340 = vld [vmem:[%s4 + $0x1a8] sm:$0xff]
  %v341 = vld [vmem:[%s4 + $0x1b0] sm:$0xff]
  %v342 = vld [vmem:[%s4 + $0x1b8] sm:$0xff]
  %v343 = vld [vmem:[%s4 + $0x1c0] sm:$0xff]
  %v344 = vld [vmem:[%s4 + $0x1c8] sm:$0xff]
  %v345 = vld [vmem:[%s4 + $0x1d0] sm:$0xff]
  %v346 = vld [vmem:[%s4 + $0x1d8] sm:$0xff]
  %v347 = vld [vmem:[%s4 + $0x1e0] sm:$0xff]
  %v348 = vld [vmem:[%s4 + $0x1e8] sm:$0xff]
  %v349 = vld [vmem:[%s4 + $0x1f0] sm:$0xff]
  %v350 = vld [vmem:[%s4 + $0x1f8] sm:$0xff]
  %351 = vmatprep.subr.mxu0 %v318
  %352 = vmatpush1.msra.mxu0 %v317
  %353 = vmatprep.subr.mxu0 %v316
  %354 = vmatpush1.msra.mxu0 %v315
  %355 = vmatprep.subr.mxu0 %v314
  %356 = vmatpush1.msra.mxu0 %v313
  %357 = vmatprep.subr.mxu0 %v312
  %358 = vmatpush1.msra.mxu0 %v311
  %359 = vmatprep.subr.mxu0 %v310
  %360 = vmatpush1.msra.mxu0 %v309
  %361 = vmatprep.subr.mxu0 %v308
  %362 = vmatpush1.msra.mxu0 %v307
  %363 = vmatprep.subr.mxu0 %v306
  %364 = vmatpush1.msra.mxu0 %v305
  %365 = vmatprep.subr.mxu0 %v304
  %366 = vmatpush1.msra.mxu0 %v303
  %367 = vmatprep.subr.mxu0 %v302
  %368 = vmatpush1.msra.mxu0 %v301
  %369 = vmatprep.subr.mxu0 %v300
  %370 = vmatpush1.msra.mxu0 %v299
  %371 = vmatprep.subr.mxu0 %v298
  %372 = vmatpush1.msra.mxu0 %v297
  %373 = vmatprep.subr.mxu0 %v296
  %374 = vmatpush1.msra.mxu0 %v295
  %375 = vmatprep.subr.mxu0 %v294
  %376 = vmatpush1.msra.mxu0 %v293
  %377 = vmatprep.subr.mxu0 %v292
  %378 = vmatpush1.msra.mxu0 %v291
  %379 = vmatprep.subr.mxu0 %v290
  %380 = vmatpush1.msra.mxu0 %v289
  %381 = vmatprep.subr.mxu0 %v288
  %382 = vmatpush1.msra.mxu0 %v287
  %383 = vmatprep.subr.mxu0 %v350
  %384 = vmatpush2.msra.mxu0 %v349
  %385 = vmatprep.subr.mxu0 %v348
  %386 = vmatpush2.msra.mxu0 %v347
  %387 = vmatprep.subr.mxu0 %v346
  %388 = vmatpush2.msra.mxu0 %v345
  %389 = vmatprep.subr.mxu0 %v344
  %390 = vmatpush2.msra.mxu0 %v343
  %391 = vmatprep.subr.mxu0 %v342
  %392 = vmatpush2.msra.mxu0 %v341
  %393 = vmatprep.subr.mxu0 %v340
  %394 = vmatpush2.msra.mxu0 %v339
  %395 = vmatprep.subr.mxu0 %v338
  %396 = vmatpush2.msra.mxu0 %v337
  %397 = vmatprep.subr.mxu0 %v336
  %398 = vmatpush2.msra.mxu0 %v335
  %399 = vmatprep.subr.mxu0 %v334
  %400 = vmatpush2.msra.mxu0 %v333
  %401 = vmatprep.subr.mxu0 %v332
  %402 = vmatpush2.msra.mxu0 %v331
  %403 = vmatprep.subr.mxu0 %v330
  %404 = vmatpush2.msra.mxu0 %v329
  %405 = vmatprep.subr.mxu0 %v328
  %406 = vmatpush2.msra.mxu0 %v327
  %407 = vmatprep.subr.mxu0 %v326
  %408 = vmatpush2.msra.mxu0 %v325
  %409 = vmatprep.subr.mxu0 %v324
  %410 = vmatpush2.msra.mxu0 %v323
  %411 = vmatprep.subr.mxu0 %v322
  %412 = vmatpush2.msra.mxu0 %v321
  %413 = vmatprep.subr.mxu0 %v320
  %414 = vmatpush2.msra.mxu0 %v319
  %415 = vmatprep.mubr.f32.mxu0 %v258
  %416 = vmatmul.mubr.f32.gmra.mxu0 %v256
  %v417 = vpop.f32.mrf.mxu0
  %v418 = vadd.f32 0.0, %v417
  %v419 = vpop.f32.mrf.mxu0
  %v420 = vadd.f32 0.0, %v419
  %421 = vmatprep.mubr.f32.mxu0 %v262
  %422 = vmatmul.mubr.f32.gmra.mxu0 %v260
  %v423 = vpop.f32.mrf.mxu0
  %v424 = vadd.f32 0.0, %v423
  %v425 = vpop.f32.mrf.mxu0
  %v426 = vadd.f32 0.0, %v425
  %427 = vmatprep.mubr.f32.mxu0 %v266
  %428 = vmatmul.mubr.f32.gmra.mxu0 %v264
  %v429 = vpop.f32.mrf.mxu0
  %v430 = vadd.f32 0.0, %v429
  %v431 = vpop.f32.mrf.mxu0
  %v432 = vadd.f32 0.0, %v431
  %433 = vmatprep.mubr.f32.mxu0 %v270
  %434 = vmatmul.mubr.f32.gmra.mxu0 %v268
  %v435 = vpop.f32.mrf.mxu0
  %v436 = vadd.f32 0.0, %v435
  %v437 = vpop.f32.mrf.mxu0
  %v438 = vadd.f32 0.0, %v437
  %439 = vmatprep.mubr.f32.mxu0 %v274
  %440 = vmatmul.mubr.f32.gmra.mxu0 %v272
  %v441 = vpop.f32.mrf.mxu0
  %v442 = vadd.f32 0.0, %v441
  %v443 = vpop.f32.mrf.mxu0
  %v444 = vadd.f32 0.0, %v443
  %445 = vmatprep.mubr.f32.mxu0 %v278
  %446 = vmatmul.mubr.f32.gmra.mxu0 %v276
  %v447 = vpop.f32.mrf.mxu0
  %v448 = vadd.f32 0.0, %v447
  %v449 = vpop.f32.mrf.mxu0
  %v450 = vadd.f32 0.0, %v449
  %451 = vmatprep.mubr.f32.mxu0 %v282
  %452 = vmatmul.mubr.f32.gmra.mxu0 %v280
  %v453 = vpop.f32.mrf.mxu0
  %v454 = vadd.f32 0.0, %v453
  %v455 = vpop.f32.mrf.mxu0
  %v456 = vadd.f32 0.0, %v455
  %457 = vmatprep.mubr.f32.mxu0 %v286
  %458 = vmatmul.mubr.f32.gmra.mxu0 %v284
  %v459 = vpop.f32.mrf.mxu0
  %v460 = vadd.f32 0.0, %v459
  %v461 = vpop.f32.mrf.mxu0
  %v462 = vadd.f32 0.0, %v461
  %463 = vdwg.mxu0
  %v464 = vmax.f32 %v418, 1e-37
  %v465 = vmax.f32 %v420, 1e-37
  %v466 = vmax.f32 %v424, 1e-37
  %v467 = vmax.f32 %v426, 1e-37
  %v468 = vmax.f32 %v430, 1e-37
  %v469 = vmax.f32 %v432, 1e-37
  %v470 = vmax.f32 %v436, 1e-37
  %v471 = vmax.f32 %v438, 1e-37
  %v472 = vmax.f32 %v442, 1e-37
  %v473 = vmax.f32 %v444, 1e-37
  %v474 = vmax.f32 %v448, 1e-37
  %v475 = vmax.f32 %v450, 1e-37
  %v476 = vmax.f32 %v454, 1e-37
  %v477 = vmax.f32 %v456, 1e-37
  %v478 = vmax.f32 %v460, 1e-37
  %v479 = vmax.f32 %v462, 1e-37
  %v480 = vrcp.pop %v464
  %v481 = vmul.f32 %v256, %v480
  %v482 = vrcp.pop %v465
  %v483 = vmul.f32 %v258, %v482
  %v484 = vrcp.pop %v466
  %v485 = vmul.f32 %v260, %v484
  %v486 = vrcp.pop %v467
  %v487 = vmul.f32 %v262, %v486
  %v488 = vrcp.pop %v468
  %v489 = vmul.f32 %v264, %v488
  %v490 = vrcp.pop %v469
  %v491 = vmul.f32 %v266, %v490
  %v492 = vrcp.pop %v470
  %v493 = vmul.f32 %v268, %v492
  %v494 = vrcp.pop %v471
  %v495 = vmul.f32 %v270, %v494
  %v496 = vrcp.pop %v472
  %v497 = vmul.f32 %v272, %v496
  %v498 = vrcp.pop %v473
  %v499 = vmul.f32 %v274, %v498
  %v500 = vrcp.pop %v474
  %v501 = vmul.f32 %v276, %v500
  %v502 = vrcp.pop %v475
  %v503 = vmul.f32 %v278, %v502
  %v504 = vrcp.pop %v476
  %v505 = vmul.f32 %v280, %v504
  %v506 = vrcp.pop %v477
  %v507 = vmul.f32 %v282, %v506
  %v508 = vrcp.pop %v478
  %v509 = vmul.f32 %v284, %v508
  %v510 = vrcp.pop %v479
  %v511 = vmul.f32 %v286, %v510
  %v512 = vld [vmem:[%s5] sm:$0xff]
  %v513 = vld [vmem:[%s5 + $0x8] sm:$0xff]
  %v514 = vld [vmem:[%s5 + $0x10] sm:$0xff]
  %v515 = vld [vmem:[%s5 + $0x18] sm:$0xff]
  %v516 = vld [vmem:[%s5 + $0x20] sm:$0xff]
  %v517 = vld [vmem:[%s5 + $0x28] sm:$0xff]
  %v518 = vld [vmem:[%s5 + $0x30] sm:$0xff]
  %v519 = vld [vmem:[%s5 + $0x38] sm:$0xff]
  %v520 = vld [vmem:[%s5 + $0x40] sm:$0xff]
  %v521 = vld [vmem:[%s5 + $0x48] sm:$0xff]
  %v522 = vld [vmem:[%s5 + $0x50] sm:$0xff]
  %v523 = vld [vmem:[%s5 + $0x58] sm:$0xff]
  %v524 = vld [vmem:[%s5 + $0x60] sm:$0xff]
  %v525 = vld [vmem:[%s5 + $0x68] sm:$0xff]
  %v526 = vld [vmem:[%s5 + $0x70] sm:$0xff]
  %v527 = vld [vmem:[%s5 + $0x78] sm:$0xff]
  %s528 = sld [smem:[#allocation3]]
  %v529 = vstv %s528
  %vm530 = vcmp.ge.s32.totalorder %v512, %v529
  %vm531 = vcmp.ge.s32.totalorder %v513, %v529
  %vm532 = vcmp.ge.s32.totalorder %v514, %v529
  %vm533 = vcmp.ge.s32.totalorder %v515, %v529
  %vm534 = vcmp.ge.s32.totalorder %v516, %v529
  %vm535 = vcmp.ge.s32.totalorder %v517, %v529
  %vm536 = vcmp.ge.s32.totalorder %v518, %v529
  %vm537 = vcmp.ge.s32.totalorder %v519, %v529
  %vm538 = vcmp.ge.s32.totalorder %v520, %v529
  %vm539 = vcmp.ge.s32.totalorder %v521, %v529
  %vm540 = vcmp.ge.s32.totalorder %v522, %v529
  %vm541 = vcmp.ge.s32.totalorder %v523, %v529
  %vm542 = vcmp.ge.s32.totalorder %v524, %v529
  %vm543 = vcmp.ge.s32.totalorder %v525, %v529
  %vm544 = vcmp.ge.s32.totalorder %v526, %v529
  %vm545 = vcmp.ge.s32.totalorder %v527, %v529
  %v546 = vsel %vm530, %v481, 0.0
  %v547 = vsel %vm531, %v483, 0.0
  %v548 = vsel %vm532, %v485, 0.0
  %v549 = vsel %vm533, %v487, 0.0
  %v550 = vsel %vm534, %v489, 0.0
  %v551 = vsel %vm535, %v491, 0.0
  %v552 = vsel %vm536, %v493, 0.0
  %v553 = vsel %vm537, %v495, 0.0
  %v554 = vsel %vm538, %v497, 0.0
  %v555 = vsel %vm539, %v499, 0.0
  %v556 = vsel %vm540, %v501, 0.0
  %v557 = vsel %vm541, %v503, 0.0
  %v558 = vsel %vm542, %v505, 0.0
  %v559 = vsel %vm543, %v507, 0.0
  %v560 = vsel %vm544, %v509, 0.0
  %v561 = vsel %vm545, %v511, 0.0
  %v562 = vld [vmem:[%s3] sm:$0xff]
  %v563 = vld [vmem:[%s3 + $0x8] sm:$0xff]
  %v564 = vld [vmem:[%s3 + $0x10] sm:$0xff]
  %v565 = vld [vmem:[%s3 + $0x18] sm:$0xff]
  %v566 = vld [vmem:[%s3 + $0x20] sm:$0xff]
  %v567 = vld [vmem:[%s3 + $0x28] sm:$0xff]
  %v568 = vld [vmem:[%s3 + $0x30] sm:$0xff]
  %v569 = vld [vmem:[%s3 + $0x38] sm:$0xff]
  %v570 = vld [vmem:[%s3 + $0x40] sm:$0xff]
  %v571 = vld [vmem:[%s3 + $0x48] sm:$0xff]
  %v572 = vld [vmem:[%s3 + $0x50] sm:$0xff]
  %v573 = vld [vmem:[%s3 + $0x58] sm:$0xff]
  %v574 = vld [vmem:[%s3 + $0x60] sm:$0xff]
  %v575 = vld [vmem:[%s3 + $0x68] sm:$0xff]
  %v576 = vld [vmem:[%s3 + $0x70] sm:$0xff]
  %v577 = vld [vmem:[%s3 + $0x78] sm:$0xff]
  %v578 = vld [vmem:[%s3 + $0x80] sm:$0xff]
  %v579 = vld [vmem:[%s3 + $0x88] sm:$0xff]
  %v580 = vld [vmem:[%s3 + $0x90] sm:$0xff]
  %v581 = vld [vmem:[%s3 + $0x98] sm:$0xff]
  %v582 = vld [vmem:[%s3 + $0xa0] sm:$0xff]
  %v583 = vld [vmem:[%s3 + $0xa8] sm:$0xff]
  %v584 = vld [vmem:[%s3 + $0xb0] sm:$0xff]
  %v585 = vld [vmem:[%s3 + $0xb8] sm:$0xff]
  %v586 = vld [vmem:[%s3 + $0xc0] sm:$0xff]
  %v587 = vld [vmem:[%s3 + $0xc8] sm:$0xff]
  %v588 = vld [vmem:[%s3 + $0xd0] sm:$0xff]
  %v589 = vld [vmem:[%s3 + $0xd8] sm:$0xff]
  %v590 = vld [vmem:[%s3 + $0xe0] sm:$0xff]
  %v591 = vld [vmem:[%s3 + $0xe8] sm:$0xff]
  %v592 = vld [vmem:[%s3 + $0xf0] sm:$0xff]
  %v593 = vld [vmem:[%s3 + $0xf8] sm:$0xff]
  %v594 = vld [vmem:[%s3 + $0x100] sm:$0xff]
  %v595 = vld [vmem:[%s3 + $0x108] sm:$0xff]
  %v596 = vld [vmem:[%s3 + $0x110] sm:$0xff]
  %v597 = vld [vmem:[%s3 + $0x118] sm:$0xff]
  %v598 = vld [vmem:[%s3 + $0x120] sm:$0xff]
  %v599 = vld [vmem:[%s3 + $0x128] sm:$0xff]
  %v600 = vld [vmem:[%s3 + $0x130] sm:$0xff]
  %v601 = vld [vmem:[%s3 + $0x138] sm:$0xff]
  %v602 = vld [vmem:[%s3 + $0x140] sm:$0xff]
  %v603 = vld [vmem:[%s3 + $0x148] sm:$0xff]
  %v604 = vld [vmem:[%s3 + $0x150] sm:$0xff]
  %v605 = vld [vmem:[%s3 + $0x158] sm:$0xff]
  %v606 = vld [vmem:[%s3 + $0x160] sm:$0xff]
  %v607 = vld [vmem:[%s3 + $0x168] sm:$0xff]
  %v608 = vld [vmem:[%s3 + $0x170] sm:$0xff]
  %v609 = vld [vmem:[%s3 + $0x178] sm:$0xff]
  %v610 = vld [vmem:[%s3 + $0x180] sm:$0xff]
  %v611 = vld [vmem:[%s3 + $0x188] sm:$0xff]
  %v612 = vld [vmem:[%s3 + $0x190] sm:$0xff]
  %v613 = vld [vmem:[%s3 + $0x198] sm:$0xff]
  %v614 = vld [vmem:[%s3 + $0x1a0] sm:$0xff]
  %v615 = vld [vmem:[%s3 + $0x1a8] sm:$0xff]
  %v616 = vld [vmem:[%s3 + $0x1b0] sm:$0xff]
  %v617 = vld [vmem:[%s3 + $0x1b8] sm:$0xff]
  %v618 = vld [vmem:[%s3 + $0x1c0] sm:$0xff]
  %v619 = vld [vmem:[%s3 + $0x1c8] sm:$0xff]
  %v620 = vld [vmem:[%s3 + $0x1d0] sm:$0xff]
  %v621 = vld [vmem:[%s3 + $0x1d8] sm:$0xff]
  %v622 = vld [vmem:[%s3 + $0x1e0] sm:$0xff]
  %v623 = vld [vmem:[%s3 + $0x1e8] sm:$0xff]
  %v624 = vld [vmem:[%s3 + $0x1f0] sm:$0xff]
  %v625 = vld [vmem:[%s3 + $0x1f8] sm:$0xff]
  %626 = vmatprep.subr.mxu0 %v593
  %627 = vmatpush1.msra.mxu0 %v592
  %628 = vmatprep.subr.mxu0 %v591
  %629 = vmatpush1.msra.mxu0 %v590
  %630 = vmatprep.subr.mxu0 %v589
  %631 = vmatpush1.msra.mxu0 %v588
  %632 = vmatprep.subr.mxu0 %v587
  %633 = vmatpush1.msra.mxu0 %v586
  %634 = vmatprep.subr.mxu0 %v585
  %635 = vmatpush1.msra.mxu0 %v584
  %636 = vmatprep.subr.mxu0 %v583
  %637 = vmatpush1.msra.mxu0 %v582
  %638 = vmatprep.subr.mxu0 %v581
  %639 = vmatpush1.msra.mxu0 %v580
  %640 = vmatprep.subr.mxu0 %v579
  %641 = vmatpush1.msra.mxu0 %v578
  %642 = vmatprep.subr.mxu0 %v577
  %643 = vmatpush1.msra.mxu0 %v576
  %644 = vmatprep.subr.mxu0 %v575
  %645 = vmatpush1.msra.mxu0 %v574
  %646 = vmatprep.subr.mxu0 %v573
  %647 = vmatpush1.msra.mxu0 %v572
  %648 = vmatprep.subr.mxu0 %v571
  %649 = vmatpush1.msra.mxu0 %v570
  %650 = vmatprep.subr.mxu0 %v569
  %651 = vmatpush1.msra.mxu0 %v568
  %652 = vmatprep.subr.mxu0 %v567
  %653 = vmatpush1.msra.mxu0 %v566
  %654 = vmatprep.subr.mxu0 %v565
  %655 = vmatpush1.msra.mxu0 %v564
  %656 = vmatprep.subr.mxu0 %v563
  %657 = vmatpush1.msra.mxu0 %v562
  %658 = vmatprep.subr.mxu0 %v625
  %659 = vmatpush2.msra.mxu0 %v624
  %660 = vmatprep.subr.mxu0 %v623
  %661 = vmatpush2.msra.mxu0 %v622
  %662 = vmatprep.subr.mxu0 %v621
  %663 = vmatpush2.msra.mxu0 %v620
  %664 = vmatprep.subr.mxu0 %v619
  %665 = vmatpush2.msra.mxu0 %v618
  %666 = vmatprep.subr.mxu0 %v617
  %667 = vmatpush2.msra.mxu0 %v616
  %668 = vmatprep.subr.mxu0 %v615
  %669 = vmatpush2.msra.mxu0 %v614
  %670 = vmatprep.subr.mxu0 %v613
  %671 = vmatpush2.msra.mxu0 %v612
  %672 = vmatprep.subr.mxu0 %v611
  %673 = vmatpush2.msra.mxu0 %v610
  %674 = vmatprep.subr.mxu0 %v609
  %675 = vmatpush2.msra.mxu0 %v608
  %676 = vmatprep.subr.mxu0 %v607
  %677 = vmatpush2.msra.mxu0 %v606
  %678 = vmatprep.subr.mxu0 %v605
  %679 = vmatpush2.msra.mxu0 %v604
  %680 = vmatprep.subr.mxu0 %v603
  %681 = vmatpush2.msra.mxu0 %v602
  %682 = vmatprep.subr.mxu0 %v601
  %683 = vmatpush2.msra.mxu0 %v600
  %684 = vmatprep.subr.mxu0 %v599
  %685 = vmatpush2.msra.mxu0 %v598
  %686 = vmatprep.subr.mxu0 %v597
  %687 = vmatpush2.msra.mxu0 %v596
  %688 = vmatprep.subr.mxu0 %v595
  %689 = vmatpush2.msra.mxu0 %v594
  %690 = vmatprep.mubr.f32.mxu0 %v547
  %691 = vmatmul.mubr.f32.gmra.mxu0 %v546
  %v692 = vpop.f32.mrf.mxu0
  %v693 = vadd.f32 0.0, %v692
  %v694 = vpop.f32.mrf.mxu0
  %v695 = vadd.f32 0.0, %v694
  %696 = vmatprep.mubr.f32.mxu0 %v549
  %697 = vmatmul.mubr.f32.gmra.mxu0 %v548
  %v698 = vpop.f32.mrf.mxu0
  %v699 = vadd.f32 0.0, %v698
  %v700 = vpop.f32.mrf.mxu0
  %v701 = vadd.f32 0.0, %v700
  %702 = vmatprep.mubr.f32.mxu0 %v551
  %703 = vmatmul.mubr.f32.gmra.mxu0 %v550
  %v704 = vpop.f32.mrf.mxu0
  %v705 = vadd.f32 0.0, %v704
  %v706 = vpop.f32.mrf.mxu0
  %v707 = vadd.f32 0.0, %v706
  %708 = vmatprep.mubr.f32.mxu0 %v553
  %709 = vmatmul.mubr.f32.gmra.mxu0 %v552
  %v710 = vpop.f32.mrf.mxu0
  %v711 = vadd.f32 0.0, %v710
  %v712 = vpop.f32.mrf.mxu0
  %v713 = vadd.f32 0.0, %v712
  %714 = vmatprep.mubr.f32.mxu0 %v555
  %715 = vmatmul.mubr.f32.gmra.mxu0 %v554
  %v716 = vpop.f32.mrf.mxu0
  %v717 = vadd.f32 0.0, %v716
  %v718 = vpop.f32.mrf.mxu0
  %v719 = vadd.f32 0.0, %v718
  %720 = vmatprep.mubr.f32.mxu0 %v557
  %721 = vmatmul.mubr.f32.gmra.mxu0 %v556
  %v722 = vpop.f32.mrf.mxu0
  %v723 = vadd.f32 0.0, %v722
  %v724 = vpop.f32.mrf.mxu0
  %v725 = vadd.f32 0.0, %v724
  %726 = vmatprep.mubr.f32.mxu0 %v559
  %727 = vmatmul.mubr.f32.gmra.mxu0 %v558
  %v728 = vpop.f32.mrf.mxu0
  %v729 = vadd.f32 0.0, %v728
  %v730 = vpop.f32.mrf.mxu0
  %v731 = vadd.f32 0.0, %v730
  %732 = vmatprep.mubr.f32.mxu0 %v561
  %733 = vmatmul.mubr.f32.gmra.mxu0 %v560
  %v734 = vpop.f32.mrf.mxu0
  %v735 = vadd.f32 0.0, %v734
  %v736 = vpop.f32.mrf.mxu0
  %v737 = vadd.f32 0.0, %v736
  %738 = vdwg.mxu0
  %739 = vst [vmem:[%s6] sm:$0xff] %v693
  %740 = vst [vmem:[%s6 + $0x8] sm:$0xff] %v695
  %741 = vst [vmem:[%s6 + $0x10] sm:$0xff] %v699
  %742 = vst [vmem:[%s6 + $0x18] sm:$0xff] %v701
  %743 = vst [vmem:[%s6 + $0x20] sm:$0xff] %v705
  %744 = vst [vmem:[%s6 + $0x28] sm:$0xff] %v707
  %745 = vst [vmem:[%s6 + $0x30] sm:$0xff] %v711
  %746 = vst [vmem:[%s6 + $0x38] sm:$0xff] %v713
  %747 = vst [vmem:[%s6 + $0x40] sm:$0xff] %v717
  %748 = vst [vmem:[%s6 + $0x48] sm:$0xff] %v719
  %749 = vst [vmem:[%s6 + $0x50] sm:$0xff] %v723
  %750 = vst [vmem:[%s6 + $0x58] sm:$0xff] %v725
  %751 = vst [vmem:[%s6 + $0x60] sm:$0xff] %v729
  %752 = vst [vmem:[%s6 + $0x68] sm:$0xff] %v731
  %753 = vst [vmem:[%s6 + $0x70] sm:$0xff] %v735
  %754 = vst [vmem:[%s6 + $0x78] sm:$0xff] %v737
  // Predicated region
  $region22: #{sdpa_with_dropout.1} parent=0 // pred_check
    _
  $region23: #{sdpa_with_dropout.1} parent=0 // pred_check_branch
    %756 = sbr.rel (0) target = $region25
  $region24: #{sdpa_with_dropout.1} parent=0 // pred_region
    _
  $region25: #{sdpa_with_dropout.1} parent=0 // pred_fallthru
    _
  // Predicated region
  $region26: #{sdpa_with_dropout.1} parent=0 // pred_check
    _
  $region27: #{sdpa_with_dropout.1} parent=0 // pred_check_branch
    %758 = sbr.rel (0) target = $region29
  $region28: #{sdpa_with_dropout.1} parent=0 // pred_region
    _
  $region29: #{sdpa_with_dropout.1} parent=0 // pred_fallthru
    _

</llo_original>
